<compile_context>
chip_gen: v5e
topology: v5e:2x2
jax: 0.10.0
libtpu: 0.0.40
codegen_flags: <defaults>
</compile_context>

<pallas_src>
import functools

import jax
import jax.numpy as jnp
from jax.experimental import pallas as pl
from jax.experimental.pallas import tpu as pltpu


_CB = 256        # rows per in-kernel chunk (keeps intermediates ~vreg-sized)
_MAX_TB = 8192   # rows per grid step cap (double-buffered VMEM stays ~20 MiB)


def _round_up(n, m):
    return ((n + m - 1) // m) * m


def heuristic_net_kernel(x_ref, w1_ref, b1_ref, w2_ref, b2_ref, w3_ref, b3_ref,
                         o_ref, *, cb):
    # x_ref: (TB, 28) f32 tile of the batch in its native layout.
    # w1_ref/w2_ref: pre-transposed (in, out) bf16 weights; w3_ref: (1, 40) bf16 row.
    # b*_ref: f32 rows.  o_ref: (TB, 1) f32.
    n_chunks = x_ref.shape[0] // cb

    # Hoist the tiny, grid-resident weights/biases out of the chunk loop.
    w1 = w1_ref[...]                        # (28, 40) bf16
    w2 = w2_ref[...]                        # (40, 40) bf16
    w3 = w3_ref[...].astype(jnp.float32)    # (1, 40)  f32
    b1 = b1_ref[...]                        # (1, 40)  f32
    b2 = b2_ref[...]                        # (1, 40)  f32
    b3 = b3_ref[...]                        # (1, 1)   f32

    @pl.loop(0, n_chunks)
    def _(j):
        r0 = pl.multiple_of(j * cb, cb)
        xb = x_ref[pl.ds(r0, cb), :].astype(jnp.bfloat16)                  # (cb, 28) bf16
        h1 = jnp.dot(xb, w1, preferred_element_type=jnp.float32)          # (cb, 40) f32
        h1 = jnp.maximum(h1 + b1, 0.0).astype(jnp.bfloat16)               # bf16 operand
        h2 = jnp.dot(h1, w2, preferred_element_type=jnp.float32)          # (cb, 40) f32
        h2 = jnp.maximum(h2 + b2, 0.0).astype(jnp.bfloat16)
        # Layer 3 (40 -> 1): VPU multiply + XLU lane reduction, f32.
        out = jnp.sum(h2.astype(jnp.float32) * w3, axis=-1, keepdims=True) + b3
        o_ref[pl.ds(r0, cb), :] = out


@functools.partial(jax.jit, static_argnames=("tb",))
def heuristic_net_forward(x, params, *, tb=_MAX_TB):
    """x: (B, input_size). params: PyTorch-native {w1,b1,w2,b2,w3,b3}, w stored (out, in)."""
    B, in_size = x.shape
    hid = params["w1"].shape[0]
    cb = _CB

    # ---- tile sizing -------------------------------------------------------------
    b_ru = _round_up(max(B, 1), cb)
    tb_eff = min(tb, b_ru, _MAX_TB)
    if b_ru >= 2 * cb:                         # >=2 grid steps so v7x's 2 TCs both work
        tb_eff = min(tb_eff, _round_up(pl.cdiv(b_ru, 2), cb))
    tb_eff = max(cb, _round_up(tb_eff, cb))
    B_pad = _round_up(b_ru, tb_eff)
    grid = (B_pad // tb_eff,)

    if B_pad != B:
        x = jnp.pad(x, ((0, B_pad - B), (0, 0)))   # padded rows are sliced off below

    # ---- weights: PyTorch-native (out, in) -> (in, out) bf16; biases as f32 rows --
    w1t = jnp.transpose(params["w1"]).astype(jnp.bfloat16)       # (28, 40)
    w2t = jnp.transpose(params["w2"]).astype(jnp.bfloat16)       # (40, 40)
    w3r = params["w3"].astype(jnp.bfloat16).reshape(1, hid)      # (1, 40)
    b1 = params["b1"].astype(jnp.float32).reshape(1, hid)
    b2 = params["b2"].astype(jnp.float32).reshape(1, hid)
    b3 = params["b3"].astype(jnp.float32).reshape(1, 1)

    # ---- VMEM budget: (tb,28) f32 x tile and (tb,1) f32 out tile both lane-pad to
    # 128 lanes and are double-buffered; weights + internal scratch fit the margin. ----
    vmem_limit = 2 * 2 * tb_eff * 128 * 4 + (4 << 20)
    vmem_limit = int(min(max(vmem_limit, 32 << 20), 48 << 20))

    cost = pl.CostEstimate(
        flops=2 * B_pad * (in_size * hid + hid * hid + hid),
        transcendentals=0,
        bytes_accessed=(B_pad * in_size * x.dtype.itemsize + B_pad * 4
                        + 2 * (in_size * hid + hid * hid + hid) + 4 * (2 * hid + 1)),
    )

    const = lambda a: pl.BlockSpec(a.shape, lambda i: (0,) * a.ndim)

    out = pl.pallas_call(
        functools.partial(heuristic_net_kernel, cb=cb),
        out_shape=jax.ShapeDtypeStruct((B_pad, 1), jnp.float32),
        grid_spec=pltpu.PrefetchScalarGridSpec(
            num_scalar_prefetch=0,
            grid=grid,
            in_specs=[
                pl.BlockSpec((tb_eff, in_size), lambda i: (i, 0)),   # stream x row tiles
                const(w1t), const(b1), const(w2t), const(b2), const(w3r), const(b3),
            ],
            out_specs=pl.BlockSpec((tb_eff, 1), lambda i: (i, 0)),
        ),
        compiler_params=pltpu.CompilerParams(
            dimension_semantics=("parallel",),
            vmem_limit_bytes=vmem_limit,
        ),
        cost_estimate=cost,
    )(x, w1t, b1, w2t, b2, w3r, b3)

    return out[:B]                                                  # (B, 1)


def init_params(key, input_size=28, hidden_size=40):
    """PyTorch-style init: U(-1/sqrt(fan_in), 1/sqrt(fan_in)); weights stored (out, in)."""
    ks = jax.random.split(key, 6)

    def linear(kw, kb, fan_in, fan_out):
        bound = 1.0 / jnp.sqrt(jnp.float32(fan_in))
        w = jax.random.uniform(kw, (fan_out, fan_in), jnp.float32, -bound, bound)
        b = jax.random.uniform(kb, (fan_out,), jnp.float32, -bound, bound)
        return w, b

    w1, b1 = linear(ks[0], ks[1], input_size, hidden_size)
    w2, b2 = linear(ks[2], ks[3], hidden_size, hidden_size)
    w3, b3 = linear(ks[4], ks[5], hidden_size, 1)
    return {"w1": w1, "b1": b1, "w2": w2, "b2": b2, "w3": w3, "b3": b3}


def reference_forward(x, p):
    """Reference with the same bf16 quantization points as the kernel, f32 compute."""
    q = lambda a: a.astype(jnp.bfloat16).astype(jnp.float32)
    h1 = jnp.maximum(q(x) @ q(p["w1"]).T + p["b1"], 0.0)
    h2 = jnp.maximum(q(h1) @ q(p["w2"]).T + p["b2"], 0.0)
    return q(h2) @ q(p["w3"]).T + p["b3"]


if __name__ == "__main__":
    key = jax.random.PRNGKey(0)
    k_x, k_p = jax.random.split(key)

    batch, input_size, hidden_size = 8, 28, 40
    x = jax.random.normal(k_x, (batch, input_size), dtype=jnp.float32)
    params = init_params(k_p, input_size, hidden_size)

    out = heuristic_net_forward(x, params)
    out = jax.block_until_ready(out)

    ref = reference_forward(x, params)
    assert out.shape == (batch, 1), out.shape
    err = float(jnp.max(jnp.abs(out - ref)))
    assert jnp.allclose(out, ref, atol=5e-3, rtol=5e-3), err
    print("KERNEL_OK")
</pallas_src>

<mosaic_0001>
module attributes {stable_mosaic.version = 11 : i64} {
  func.func @heuristic_net_kernel(%arg0: i32, %arg1: memref<256x28xf32, #tpu.memory_space<vmem>>, %arg2: memref<28x40xbf16, #tpu.memory_space<vmem>>, %arg3: memref<1x40xf32, #tpu.memory_space<vmem>>, %arg4: memref<40x40xbf16, #tpu.memory_space<vmem>>, %arg5: memref<1x40xf32, #tpu.memory_space<vmem>>, %arg6: memref<1x40xbf16, #tpu.memory_space<vmem>>, %arg7: memref<1x1xf32, #tpu.memory_space<vmem>>, %arg8: memref<256x1xf32, #tpu.memory_space<vmem>>) attributes {dimension_semantics = [#tpu.dimension_semantics<parallel>], iteration_bounds = array<i64: 1>, scalar_prefetch = 0 : i64, scratch_operands = 0 : i64, tpu.core_type = #tpu.core_type<tc>, window_params = [{transform_indices = @transform_0, window_bounds = array<i64: 256, 28>}, {pipeline_mode = #tpu.pipeline_mode<synchronous>, transform_indices = @transform_1, window_bounds = array<i64: 28, 40>}, {pipeline_mode = #tpu.pipeline_mode<synchronous>, transform_indices = @transform_2, window_bounds = array<i64: 1, 40>}, {pipeline_mode = #tpu.pipeline_mode<synchronous>, transform_indices = @transform_3, window_bounds = array<i64: 40, 40>}, {pipeline_mode = #tpu.pipeline_mode<synchronous>, transform_indices = @transform_4, window_bounds = array<i64: 1, 40>}, {pipeline_mode = #tpu.pipeline_mode<synchronous>, transform_indices = @transform_5, window_bounds = array<i64: 1, 40>}, {pipeline_mode = #tpu.pipeline_mode<synchronous>, transform_indices = @transform_6, window_bounds = array<i64: 1, 1>}, {transform_indices = @transform_7, window_bounds = array<i64: 256, 1>}]} {
    %c0 = arith.constant 0 : index
    %c0_0 = arith.constant 0 : index
    %0 = vector.load %arg2[%c0, %c0_0] : memref<28x40xbf16, #tpu.memory_space<vmem>>, vector<28x40xbf16>
    %c0_1 = arith.constant 0 : index
    %c0_2 = arith.constant 0 : index
    %1 = vector.load %arg4[%c0_1, %c0_2] : memref<40x40xbf16, #tpu.memory_space<vmem>>, vector<40x40xbf16>
    %c0_3 = arith.constant 0 : index
    %c0_4 = arith.constant 0 : index
    %2 = vector.load %arg6[%c0_3, %c0_4] : memref<1x40xbf16, #tpu.memory_space<vmem>>, vector<1x40xbf16>
    %3 = arith.extf %2 : vector<1x40xbf16> to vector<1x40xf32>
    %c0_5 = arith.constant 0 : index
    %c0_6 = arith.constant 0 : index
    %4 = vector.load %arg3[%c0_5, %c0_6] : memref<1x40xf32, #tpu.memory_space<vmem>>, vector<1x40xf32>
    %c0_7 = arith.constant 0 : index
    %c0_8 = arith.constant 0 : index
    %5 = vector.load %arg5[%c0_7, %c0_8] : memref<1x40xf32, #tpu.memory_space<vmem>>, vector<1x40xf32>
    %c0_9 = arith.constant 0 : index
    %c0_10 = arith.constant 0 : index
    %6 = vector.load %arg7[%c0_9, %c0_10] : memref<1x1xf32, #tpu.memory_space<vmem>>, vector<1x1xf32>
    %c0_i32 = arith.constant 0 : i32
    %c1_i32 = arith.constant 1 : i32
    %7 = arith.muli %c0_i32, %c1_i32 : i32
    %c0_i32_11 = arith.constant 0 : i32
    %8 = arith.addi %c0_i32_11, %7 : i32
    %c256_i32 = arith.constant 256 : i32
    %9 = arith.muli %8, %c256_i32 : i32
    %10 = tpu.assume_multiple %9, 256 : i32
    %11 = arith.index_cast %10 : i32 to index
    %c0_12 = arith.constant 0 : index
    %12 = vector.load %arg1[%11, %c0_12] : memref<256x28xf32, #tpu.memory_space<vmem>>, vector<256x28xf32>
    %13 = arith.truncf %12 : vector<256x28xf32> to vector<256x28xbf16>
    %cst = arith.constant dense<0.000000e+00> : vector<256x40xf32>
    %14 = tpu.matmul %13, %0, %cst {dimension_numbers = #tpu.dot_dimension_numbers<[1], [0], [0], [1], [0, 0, 1, 1], [], []>} : vector<256x28xbf16>, vector<28x40xbf16>, vector<256x40xf32> -> vector<256x40xf32>
    %15 = vector.broadcast %4 : vector<1x40xf32> to vector<256x40xf32>
    %16 = arith.addf %14, %15 : vector<256x40xf32>
    %cst_13 = arith.constant 0.000000e+00 : f32
    %17 = vector.broadcast %cst_13 : f32 to vector<256x40xf32>
    %18 = arith.maximumf %16, %17 : vector<256x40xf32>
    %19 = arith.truncf %18 : vector<256x40xf32> to vector<256x40xbf16>
    %cst_14 = arith.constant dense<0.000000e+00> : vector<256x40xf32>
    %20 = tpu.matmul %19, %1, %cst_14 {dimension_numbers = #tpu.dot_dimension_numbers<[1], [0], [0], [1], [0, 0, 1, 1], [], []>} : vector<256x40xbf16>, vector<40x40xbf16>, vector<256x40xf32> -> vector<256x40xf32>
    %21 = vector.broadcast %5 : vector<1x40xf32> to vector<256x40xf32>
    %22 = arith.addf %20, %21 : vector<256x40xf32>
    %cst_15 = arith.constant 0.000000e+00 : f32
    %23 = vector.broadcast %cst_15 : f32 to vector<256x40xf32>
    %24 = arith.maximumf %22, %23 : vector<256x40xf32>
    %25 = arith.truncf %24 : vector<256x40xf32> to vector<256x40xbf16>
    %26 = arith.extf %25 : vector<256x40xbf16> to vector<256x40xf32>
    %27 = vector.broadcast %3 : vector<1x40xf32> to vector<256x40xf32>
    %28 = arith.mulf %26, %27 : vector<256x40xf32>
    %cst_16 = arith.constant dense<0.000000e+00> : vector<256xf32>
    %29 = vector.multi_reduction <add>, %28, %cst_16 [1] : vector<256x40xf32> to vector<256xf32>
    %30 = vector.shape_cast %29 : vector<256xf32> to vector<256x1xf32>
    %31 = vector.broadcast %6 : vector<1x1xf32> to vector<256x1xf32>
    %32 = arith.addf %30, %31 : vector<256x1xf32>
    %33 = arith.index_cast %10 : i32 to index
    %c0_17 = arith.constant 0 : index
    %34 = vector.load %arg8[%33, %c0_17] : memref<256x1xf32, #tpu.memory_space<vmem>>, vector<256x1xf32>
    tpu.vector_store %arg8[%33, %c0_17], %32 {strides = array<i32>} : memref<256x1xf32, #tpu.memory_space<vmem>>, vector<256x1xf32>,
    %c1_i32_18 = arith.constant 1 : i32
    return
  }
  func.func @transform_0(%arg0: i32) -> (i32, i32) {
    %c0_i32 = arith.constant 0 : i32
    %c0_i32_0 = arith.constant 0 : i32
    return %arg0, %c0_i32 : i32, i32
  }
  func.func @transform_1(%arg0: i32) -> (i32, i32) {
    %c0_i32 = arith.constant 0 : i32
    %c0_i32_0 = arith.constant 0 : i32
    %c0_i32_1 = arith.constant 0 : i32
    return %c0_i32, %c0_i32_0 : i32, i32
  }
  func.func @transform_2(%arg0: i32) -> (i32, i32) {
    %c0_i32 = arith.constant 0 : i32
    %c0_i32_0 = arith.constant 0 : i32
    %c0_i32_1 = arith.constant 0 : i32
    return %c0_i32, %c0_i32_0 : i32, i32
  }
  func.func @transform_3(%arg0: i32) -> (i32, i32) {
    %c0_i32 = arith.constant 0 : i32
    %c0_i32_0 = arith.constant 0 : i32
    %c0_i32_1 = arith.constant 0 : i32
    return %c0_i32, %c0_i32_0 : i32, i32
  }
  func.func @transform_4(%arg0: i32) -> (i32, i32) {
    %c0_i32 = arith.constant 0 : i32
    %c0_i32_0 = arith.constant 0 : i32
    %c0_i32_1 = arith.constant 0 : i32
    return %c0_i32, %c0_i32_0 : i32, i32
  }
  func.func @transform_5(%arg0: i32) -> (i32, i32) {
    %c0_i32 = arith.constant 0 : i32
    %c0_i32_0 = arith.constant 0 : i32
    %c0_i32_1 = arith.constant 0 : i32
    return %c0_i32, %c0_i32_0 : i32, i32
  }
  func.func @transform_6(%arg0: i32) -> (i32, i32) {
    %c0_i32 = arith.constant 0 : i32
    %c0_i32_0 = arith.constant 0 : i32
    %c0_i32_1 = arith.constant 0 : i32
    return %c0_i32, %c0_i32_0 : i32, i32
  }
  func.func @transform_7(%arg0: i32) -> (i32, i32) {
    %c0_i32 = arith.constant 0 : i32
    %c0_i32_0 = arith.constant 0 : i32
    return %arg0, %c0_i32 : i32, i32
  }
}

</mosaic_0001>

<llo_original>
// kernel: heuristic_net_forward.1
$region0: #{heuristic_net_forward.1}
  #allocation0 [shape = 'u32[]', space=smem, size = 0x4, offset = 0x4, fixed_abs, tag = 'smem constant byte address 0x4 - core index']
  #allocation1 [shape = 'u32[72,128]{1,0:T(1,128)}', space=vmem, size = 0x9000, scoped, tag = 'internal scratch']
  #allocation2 [shape = 'f32[1,1]{1,0:T(1,128)S(1)}', space=vmem, size = 0x200, scoped, tag = 'scoped memory for heuristic_net_forward.1']
  %s0 = inlined_call_operand.vmem [shape: f32[256,28], index: 0, kind: input, shape index: {}]
  %s1 = inlined_call_operand.vmem [shape: bf16[28,40], index: 1, kind: input, shape index: {}]
  %s2 = inlined_call_operand.vmem [shape: f32[1,40], index: 2, kind: input, shape index: {}]
  %s3 = inlined_call_operand.vmem [shape: bf16[40,40], index: 3, kind: input, shape index: {}]
  %s4 = inlined_call_operand.vmem [shape: f32[1,40], index: 4, kind: input, shape index: {}]
  %s5 = inlined_call_operand.vmem [shape: bf16[1,40], index: 5, kind: input, shape index: {}]
  %s6 = inlined_call_operand.<no memory space> [shape: f32[1,1], index: 6, kind: input, shape index: {}]
  %s7 = inlined_call_operand.vmem [shape: f32[256,1], index: 7, kind: output, shape index: {}]
  %s8 = sld [smem:[#allocation0]]
  $region38: #{heuristic_net_forward.1} parent=0
    _
  %s10 = ssub.s32 1, %s8
  %s11 = scalar_select 0, %s10, %s8
  %v12 = vstv %s6
  %13 = vst [vmem:[#allocation2] sm:$0x1] %v12
  // Predicated region
  $region2: #{heuristic_net_forward.1} parent=0 // pred_check
    _
  $region3: #{heuristic_net_forward.1} parent=0 // pred_check_branch
    %15 = sbr.rel (0) target = $region5
  $region4: #{heuristic_net_forward.1} parent=0 // pred_region
    _
  $region5: #{heuristic_net_forward.1} parent=0 // pred_fallthru
    _
  // Predicated region
  $region6: #{heuristic_net_forward.1} parent=0 // pred_check
    _
  $region7: #{heuristic_net_forward.1} parent=0 // pred_check_branch
    %17 = sbr.rel (0) target = $region9
  $region8: #{heuristic_net_forward.1} parent=0 // pred_region
    _
  $region9: #{heuristic_net_forward.1} parent=0 // pred_fallthru
    _
  // Predicated region
  $region10: #{heuristic_net_forward.1} parent=0 // pred_check
    _
  $region11: #{heuristic_net_forward.1} parent=0 // pred_check_branch
    %19 = sbr.rel (0) target = $region13
  $region12: #{heuristic_net_forward.1} parent=0 // pred_region
    _
  $region13: #{heuristic_net_forward.1} parent=0 // pred_fallthru
    _
  // Predicated region
  $region14: #{heuristic_net_forward.1} parent=0 // pred_check
    _
  $region15: #{heuristic_net_forward.1} parent=0 // pred_check_branch
    %21 = sbr.rel (0) target = $region17
  $region16: #{heuristic_net_forward.1} parent=0 // pred_region
    _
  $region17: #{heuristic_net_forward.1} parent=0 // pred_fallthru
    _
  // Predicated region
  $region18: #{heuristic_net_forward.1} parent=0 // pred_check
    _
  $region19: #{heuristic_net_forward.1} parent=0 // pred_check_branch
    %23 = sbr.rel (0) target = $region21
  $region20: #{heuristic_net_forward.1} parent=0 // pred_region
    _
  $region21: #{heuristic_net_forward.1} parent=0 // pred_fallthru
    _
  // Predicated region
  $region22: #{heuristic_net_forward.1} parent=0 // pred_check
    _
  $region23: #{heuristic_net_forward.1} parent=0 // pred_check_branch
    %25 = sbr.rel (0) target = $region25
  $region24: #{heuristic_net_forward.1} parent=0 // pred_region
    _
  $region25: #{heuristic_net_forward.1} parent=0 // pred_fallthru
    _
  // Predicated region
  $region26: #{heuristic_net_forward.1} parent=0 // pred_check
    _
  $region27: #{heuristic_net_forward.1} parent=0 // pred_check_branch
    %27 = sbr.rel (0) target = $region29
  $region28: #{heuristic_net_forward.1} parent=0 // pred_region
    _
  $region29: #{heuristic_net_forward.1} parent=0 // pred_fallthru
    _
  %v29 = vld [vmem:[%s1] sm:$0xf]
  %v30 = vld [vmem:[%s1 + $0x4] sm:$0xf]
  %v31 = vld [vmem:[%s1 + $0x8] sm:$0xf]
  %v32 = vld [vmem:[%s1 + $0xc] sm:$0x3]
  %v33 = vld [vmem:[%s3] sm:$0xf]
  %v34 = vld [vmem:[%s3 + $0x4] sm:$0xf]
  %v35 = vld [vmem:[%s3 + $0x8] sm:$0xf]
  %v36 = vld [vmem:[%s3 + $0xc] sm:$0xf]
  %v37 = vld [vmem:[%s3 + $0x10] sm:$0xf]
  %v38 = vld [vmem:[%s5] sm:$0x1]
  %v39 = vunpack.c.l.bf16 %v38
  %v40 = vld [vmem:[%s2] sm:$0x1]
  %v41 = vld [vmem:[%s4] sm:$0x1]
  %v42 = vld [vmem:[#allocation2] sm:$0x1]
  %v43 = vld [vmem:[%s0] sm:$0xff]
  %v44 = vld [vmem:[%s0 + $0x8] sm:$0xff]
  %v45 = vld [vmem:[%s0 + $0x10] sm:$0xff]
  %v46 = vld [vmem:[%s0 + $0x18] sm:$0xff]
  %v47 = vld [vmem:[%s0 + $0x20] sm:$0xff]
  %v48 = vld [vmem:[%s0 + $0x28] sm:$0xff]
  %v49 = vld [vmem:[%s0 + $0x30] sm:$0xff]
  %v50 = vld [vmem:[%s0 + $0x38] sm:$0xff]
  %v51 = vld [vmem:[%s0 + $0x40] sm:$0xff]
  %v52 = vld [vmem:[%s0 + $0x48] sm:$0xff]
  %v53 = vld [vmem:[%s0 + $0x50] sm:$0xff]
  %v54 = vld [vmem:[%s0 + $0x58] sm:$0xff]
  %v55 = vld [vmem:[%s0 + $0x60] sm:$0xff]
  %v56 = vld [vmem:[%s0 + $0x68] sm:$0xff]
  %v57 = vld [vmem:[%s0 + $0x70] sm:$0xff]
  %v58 = vld [vmem:[%s0 + $0x78] sm:$0xff]
  %v59 = vld [vmem:[%s0 + $0x80] sm:$0xff]
  %v60 = vld [vmem:[%s0 + $0x88] sm:$0xff]
  %v61 = vld [vmem:[%s0 + $0x90] sm:$0xff]
  %v62 = vld [vmem:[%s0 + $0x98] sm:$0xff]
  %v63 = vld [vmem:[%s0 + $0xa0] sm:$0xff]
  %v64 = vld [vmem:[%s0 + $0xa8] sm:$0xff]
  %v65 = vld [vmem:[%s0 + $0xb0] sm:$0xff]
  %v66 = vld [vmem:[%s0 + $0xb8] sm:$0xff]
  %v67 = vld [vmem:[%s0 + $0xc0] sm:$0xff]
  %v68 = vld [vmem:[%s0 + $0xc8] sm:$0xff]
  %v69 = vld [vmem:[%s0 + $0xd0] sm:$0xff]
  %v70 = vld [vmem:[%s0 + $0xd8] sm:$0xff]
  %v71 = vld [vmem:[%s0 + $0xe0] sm:$0xff]
  %v72 = vld [vmem:[%s0 + $0xe8] sm:$0xff]
  %v73 = vld [vmem:[%s0 + $0xf0] sm:$0xff]
  %v74 = vld [vmem:[%s0 + $0xf8] sm:$0xff]
  %v75 = vpack.c.bf16 %v44, %v43
  %v76 = vpack.c.bf16 %v46, %v45
  %v77 = vpack.c.bf16 %v48, %v47
  %v78 = vpack.c.bf16 %v50, %v49
  %v79 = vpack.c.bf16 %v52, %v51
  %v80 = vpack.c.bf16 %v54, %v53
  %v81 = vpack.c.bf16 %v56, %v55
  %v82 = vpack.c.bf16 %v58, %v57
  %v83 = vpack.c.bf16 %v60, %v59
  %v84 = vpack.c.bf16 %v62, %v61
  %v85 = vpack.c.bf16 %v64, %v63
  %v86 = vpack.c.bf16 %v66, %v65
  %v87 = vpack.c.bf16 %v68, %v67
  %v88 = vpack.c.bf16 %v70, %v69
  %v89 = vpack.c.bf16 %v72, %v71
  %v90 = vpack.c.bf16 %v74, %v73
  %v92 = vperm.slane %v40, 0
  %v98 = vunpack.c.l.b16 %v29
  %v99 = vunpack.c.l.b16 %v30
  %v100 = vunpack.c.l.b16 %v31
  %v101 = vunpack.c.l.b16 %v32
  %v102 = vpack.c.b16 %v99, %v98
  %v103 = vpack.c.b16 %v101, %v100
  %vm105 = vcmask 228352
  %v107 = vsel %vm105, %v75, 0
  %v110 = vsel %vm105, %v76, 0
  %v113 = vsel %vm105, %v77, 0
  %v116 = vsel %vm105, %v78, 0
  %v119 = vsel %vm105, %v79, 0
  %v122 = vsel %vm105, %v80, 0
  %v125 = vsel %vm105, %v81, 0
  %v128 = vsel %vm105, %v82, 0
  %v131 = vsel %vm105, %v83, 0
  %v134 = vsel %vm105, %v84, 0
  %v137 = vsel %vm105, %v85, 0
  %v140 = vsel %vm105, %v86, 0
  %v143 = vsel %vm105, %v87, 0
  %v146 = vsel %vm105, %v88, 0
  %v149 = vsel %vm105, %v89, 0
  %v152 = vsel %vm105, %v90, 0
  %vm154 = vcmask 1045504
  %v156 = vsel %vm154, %v103, 0
  %158 = vmatpush.bf16.msra.mxu0 0
  %159 = vmatpush.bf16.msra.mxu0 0
  %160 = vmatpush.bf16.msra.mxu0 0
  %161 = vmatpush.bf16.msra.mxu0 0
  %162 = vmatpush.bf16.msra.mxu0 0
  %163 = vmatpush.bf16.msra.mxu0 0
  %164 = vmatpush.bf16.msra.mxu0 %v156
  %165 = vmatpush.bf16.msra.mxu0 %v102
  %166 = vmatmul.bf16.gmra.mxu0 %v107
  %v167 = vpop.f32.mrf.mxu0
  %v168 = vadd.f32 %v92, %v167
  %v169 = vpop.f32.mrf.mxu0
  %v170 = vadd.f32 %v92, %v169
  %171 = vmatmul.bf16.gmra.mxu0 %v110
  %v172 = vpop.f32.mrf.mxu0
  %v173 = vadd.f32 %v92, %v172
  %v174 = vpop.f32.mrf.mxu0
  %v175 = vadd.f32 %v92, %v174
  %176 = vmatmul.bf16.gmra.mxu0 %v113
  %v177 = vpop.f32.mrf.mxu0
  %v178 = vadd.f32 %v92, %v177
  %v179 = vpop.f32.mrf.mxu0
  %v180 = vadd.f32 %v92, %v179
  %181 = vmatmul.bf16.gmra.mxu0 %v116
  %v182 = vpop.f32.mrf.mxu0
  %v183 = vadd.f32 %v92, %v182
  %v184 = vpop.f32.mrf.mxu0
  %v185 = vadd.f32 %v92, %v184
  %186 = vmatmul.bf16.gmra.mxu0 %v119
  %v187 = vpop.f32.mrf.mxu0
  %v188 = vadd.f32 %v92, %v187
  %v189 = vpop.f32.mrf.mxu0
  %v190 = vadd.f32 %v92, %v189
  %191 = vmatmul.bf16.gmra.mxu0 %v122
  %v192 = vpop.f32.mrf.mxu0
  %v193 = vadd.f32 %v92, %v192
  %v194 = vpop.f32.mrf.mxu0
  %v195 = vadd.f32 %v92, %v194
  %196 = vmatmul.bf16.gmra.mxu0 %v125
  %v197 = vpop.f32.mrf.mxu0
  %v198 = vadd.f32 %v92, %v197
  %v199 = vpop.f32.mrf.mxu0
  %v200 = vadd.f32 %v92, %v199
  %201 = vmatmul.bf16.gmra.mxu0 %v128
  %v202 = vpop.f32.mrf.mxu0
  %v203 = vadd.f32 %v92, %v202
  %v204 = vpop.f32.mrf.mxu0
  %v205 = vadd.f32 %v92, %v204
  %206 = vmatmul.bf16.gmra.mxu0 %v131
  %v207 = vpop.f32.mrf.mxu0
  %v208 = vadd.f32 %v92, %v207
  %v209 = vpop.f32.mrf.mxu0
  %v210 = vadd.f32 %v92, %v209
  %211 = vmatmul.bf16.gmra.mxu0 %v134
  %v212 = vpop.f32.mrf.mxu0
  %v213 = vadd.f32 %v92, %v212
  %v214 = vpop.f32.mrf.mxu0
  %v215 = vadd.f32 %v92, %v214
  %216 = vmatmul.bf16.gmra.mxu0 %v137
  %v217 = vpop.f32.mrf.mxu0
  %v218 = vadd.f32 %v92, %v217
  %v219 = vpop.f32.mrf.mxu0
  %v220 = vadd.f32 %v92, %v219
  %221 = vmatmul.bf16.gmra.mxu0 %v140
  %v222 = vpop.f32.mrf.mxu0
  %v223 = vadd.f32 %v92, %v222
  %v224 = vpop.f32.mrf.mxu0
  %v225 = vadd.f32 %v92, %v224
  %226 = vmatmul.bf16.gmra.mxu0 %v143
  %v227 = vpop.f32.mrf.mxu0
  %v228 = vadd.f32 %v92, %v227
  %v229 = vpop.f32.mrf.mxu0
  %v230 = vadd.f32 %v92, %v229
  %231 = vmatmul.bf16.gmra.mxu0 %v146
  %v232 = vpop.f32.mrf.mxu0
  %v233 = vadd.f32 %v92, %v232
  %v234 = vpop.f32.mrf.mxu0
  %v235 = vadd.f32 %v92, %v234
  %236 = vmatmul.bf16.gmra.mxu0 %v149
  %v237 = vpop.f32.mrf.mxu0
  %v238 = vadd.f32 %v92, %v237
  %v239 = vpop.f32.mrf.mxu0
  %v240 = vadd.f32 %v92, %v239
  %241 = vmatmul.bf16.gmra.mxu0 %v152
  %v242 = vpop.f32.mrf.mxu0
  %v243 = vadd.f32 %v92, %v242
  %v244 = vpop.f32.mrf.mxu0
  %v245 = vadd.f32 %v92, %v244
  %246 = vdwg.mxu0
  %v247 = vmax.f32 %v168, 0.0
  %v248 = vmax.f32 %v170, 0.0
  %v249 = vmax.f32 %v173, 0.0
  %v250 = vmax.f32 %v175, 0.0
  %v251 = vmax.f32 %v178, 0.0
  %v252 = vmax.f32 %v180, 0.0
  %v253 = vmax.f32 %v183, 0.0
  %v254 = vmax.f32 %v185, 0.0
  %v255 = vmax.f32 %v188, 0.0
  %v256 = vmax.f32 %v190, 0.0
  %v257 = vmax.f32 %v193, 0.0
  %v258 = vmax.f32 %v195, 0.0
  %v259 = vmax.f32 %v198, 0.0
  %v260 = vmax.f32 %v200, 0.0
  %v261 = vmax.f32 %v203, 0.0
  %v262 = vmax.f32 %v205, 0.0
  %v263 = vmax.f32 %v208, 0.0
  %v264 = vmax.f32 %v210, 0.0
  %v265 = vmax.f32 %v213, 0.0
  %v266 = vmax.f32 %v215, 0.0
  %v267 = vmax.f32 %v218, 0.0
  %v268 = vmax.f32 %v220, 0.0
  %v269 = vmax.f32 %v223, 0.0
  %v270 = vmax.f32 %v225, 0.0
  %v271 = vmax.f32 %v228, 0.0
  %v272 = vmax.f32 %v230, 0.0
  %v273 = vmax.f32 %v233, 0.0
  %v274 = vmax.f32 %v235, 0.0
  %v275 = vmax.f32 %v238, 0.0
  %v276 = vmax.f32 %v240, 0.0
  %v277 = vmax.f32 %v243, 0.0
  %v278 = vmax.f32 %v245, 0.0
  %v279 = vpack.c.bf16 %v248, %v247
  %v280 = vpack.c.bf16 %v250, %v249
  %v281 = vpack.c.bf16 %v252, %v251
  %v282 = vpack.c.bf16 %v254, %v253
  %v283 = vpack.c.bf16 %v256, %v255
  %v284 = vpack.c.bf16 %v258, %v257
  %v285 = vpack.c.bf16 %v260, %v259
  %v286 = vpack.c.bf16 %v262, %v261
  %v287 = vpack.c.bf16 %v264, %v263
  %v288 = vpack.c.bf16 %v266, %v265
  %v289 = vpack.c.bf16 %v268, %v267
  %v290 = vpack.c.bf16 %v270, %v269
  %v291 = vpack.c.bf16 %v272, %v271
  %v292 = vpack.c.bf16 %v274, %v273
  %v293 = vpack.c.bf16 %v276, %v275
  %v294 = vpack.c.bf16 %v278, %v277
  %v296 = vperm.slane %v41, 0
  %v303 = vunpack.c.l.b16 %v33
  %v304 = vunpack.c.l.b16 %v34
  %v305 = vunpack.c.l.b16 %v35
  %v306 = vunpack.c.l.b16 %v36
  %v307 = vunpack.c.l.b16 %v37
  %v308 = vpack.c.b16 %v304, %v303
  %v309 = vpack.c.b16 %v306, %v305
  %v310 = vpack.c.b16 %v307, %v307
  %vm313 = vcmask 326656
  %v315 = vsel %vm313, %v279, 0
  %v318 = vsel %vm313, %v280, 0
  %v321 = vsel %vm313, %v281, 0
  %v324 = vsel %vm313, %v282, 0
  %v327 = vsel %vm313, %v283, 0
  %v330 = vsel %vm313, %v284, 0
  %v333 = vsel %vm313, %v285, 0
  %v336 = vsel %vm313, %v286, 0
  %v339 = vsel %vm313, %v287, 0
  %v342 = vsel %vm313, %v288, 0
  %v345 = vsel %vm313, %v289, 0
  %v348 = vsel %vm313, %v290, 0
  %v351 = vsel %vm313, %v291, 0
  %v354 = vsel %vm313, %v292, 0
  %v357 = vsel %vm313, %v293, 0
  %v360 = vsel %vm313, %v294, 0
  %vm362 = vcmask 1043456
  %v364 = vsel %vm362, %v310, 0
  %366 = vmatpush.bf16.msra.mxu0 0
  %367 = vmatpush.bf16.msra.mxu0 0
  %368 = vmatpush.bf16.msra.mxu0 0
  %369 = vmatpush.bf16.msra.mxu0 0
  %370 = vmatpush.bf16.msra.mxu0 0
  %371 = vmatpush.bf16.msra.mxu0 %v364
  %372 = vmatpush.bf16.msra.mxu0 %v309
  %373 = vmatpush.bf16.msra.mxu0 %v308
  %374 = vmatmul.bf16.gmra.mxu0 %v315
  %v375 = vpop.f32.mrf.mxu0
  %v376 = vadd.f32 %v296, %v375
  %v377 = vpop.f32.mrf.mxu0
  %v378 = vadd.f32 %v296, %v377
  %379 = vmatmul.bf16.gmra.mxu0 %v318
  %v380 = vpop.f32.mrf.mxu0
  %v381 = vadd.f32 %v296, %v380
  %v382 = vpop.f32.mrf.mxu0
  %v383 = vadd.f32 %v296, %v382
  %384 = vmatmul.bf16.gmra.mxu0 %v321
  %v385 = vpop.f32.mrf.mxu0
  %v386 = vadd.f32 %v296, %v385
  %v387 = vpop.f32.mrf.mxu0
  %v388 = vadd.f32 %v296, %v387
  %389 = vmatmul.bf16.gmra.mxu0 %v324
  %v390 = vpop.f32.mrf.mxu0
  %v391 = vadd.f32 %v296, %v390
  %v392 = vpop.f32.mrf.mxu0
  %v393 = vadd.f32 %v296, %v392
  %394 = vmatmul.bf16.gmra.mxu0 %v327
  %v395 = vpop.f32.mrf.mxu0
  %v396 = vadd.f32 %v296, %v395
  %v397 = vpop.f32.mrf.mxu0
  %v398 = vadd.f32 %v296, %v397
  %399 = vmatmul.bf16.gmra.mxu0 %v330
  %v400 = vpop.f32.mrf.mxu0
  %v401 = vadd.f32 %v296, %v400
  %v402 = vpop.f32.mrf.mxu0
  %v403 = vadd.f32 %v296, %v402
  %404 = vmatmul.bf16.gmra.mxu0 %v333
  %v405 = vpop.f32.mrf.mxu0
  %v406 = vadd.f32 %v296, %v405
  %v407 = vpop.f32.mrf.mxu0
  %v408 = vadd.f32 %v296, %v407
  %409 = vmatmul.bf16.gmra.mxu0 %v336
  %v410 = vpop.f32.mrf.mxu0
  %v411 = vadd.f32 %v296, %v410
  %v412 = vpop.f32.mrf.mxu0
  %v413 = vadd.f32 %v296, %v412
  %414 = vmatmul.bf16.gmra.mxu0 %v339
  %v415 = vpop.f32.mrf.mxu0
  %v416 = vadd.f32 %v296, %v415
  %v417 = vpop.f32.mrf.mxu0
  %v418 = vadd.f32 %v296, %v417
  %419 = vmatmul.bf16.gmra.mxu0 %v342
  %v420 = vpop.f32.mrf.mxu0
  %v421 = vadd.f32 %v296, %v420
  %v422 = vpop.f32.mrf.mxu0
  %v423 = vadd.f32 %v296, %v422
  %424 = vmatmul.bf16.gmra.mxu0 %v345
  %v425 = vpop.f32.mrf.mxu0
  %v426 = vadd.f32 %v296, %v425
  %v427 = vpop.f32.mrf.mxu0
  %v428 = vadd.f32 %v296, %v427
  %429 = vmatmul.bf16.gmra.mxu0 %v348
  %v430 = vpop.f32.mrf.mxu0
  %v431 = vadd.f32 %v296, %v430
  %v432 = vpop.f32.mrf.mxu0
  %v433 = vadd.f32 %v296, %v432
  %434 = vmatmul.bf16.gmra.mxu0 %v351
  %v435 = vpop.f32.mrf.mxu0
  %v436 = vadd.f32 %v296, %v435
  %v437 = vpop.f32.mrf.mxu0
  %v438 = vadd.f32 %v296, %v437
  %439 = vmatmul.bf16.gmra.mxu0 %v354
  %v440 = vpop.f32.mrf.mxu0
  %v441 = vadd.f32 %v296, %v440
  %v442 = vpop.f32.mrf.mxu0
  %v443 = vadd.f32 %v296, %v442
  %444 = vmatmul.bf16.gmra.mxu0 %v357
  %v445 = vpop.f32.mrf.mxu0
  %v446 = vadd.f32 %v296, %v445
  %v447 = vpop.f32.mrf.mxu0
  %v448 = vadd.f32 %v296, %v447
  %449 = vmatmul.bf16.gmra.mxu0 %v360
  %v450 = vpop.f32.mrf.mxu0
  %v451 = vadd.f32 %v296, %v450
  %v452 = vpop.f32.mrf.mxu0
  %v453 = vadd.f32 %v296, %v452
  %454 = vdwg.mxu0
  %v455 = vmax.f32 %v376, 0.0
  %v456 = vmax.f32 %v378, 0.0
  %v457 = vmax.f32 %v381, 0.0
  %v458 = vmax.f32 %v383, 0.0
  %v459 = vmax.f32 %v386, 0.0
  %v460 = vmax.f32 %v388, 0.0
  %v461 = vmax.f32 %v391, 0.0
  %v462 = vmax.f32 %v393, 0.0
  %v463 = vmax.f32 %v396, 0.0
  %v464 = vmax.f32 %v398, 0.0
  %v465 = vmax.f32 %v401, 0.0
  %v466 = vmax.f32 %v403, 0.0
  %v467 = vmax.f32 %v406, 0.0
  %v468 = vmax.f32 %v408, 0.0
  %v469 = vmax.f32 %v411, 0.0
  %v470 = vmax.f32 %v413, 0.0
  %v471 = vmax.f32 %v416, 0.0
  %v472 = vmax.f32 %v418, 0.0
  %v473 = vmax.f32 %v421, 0.0
  %v474 = vmax.f32 %v423, 0.0
  %v475 = vmax.f32 %v426, 0.0
  %v476 = vmax.f32 %v428, 0.0
  %v477 = vmax.f32 %v431, 0.0
  %v478 = vmax.f32 %v433, 0.0
  %v479 = vmax.f32 %v436, 0.0
  %v480 = vmax.f32 %v438, 0.0
  %v481 = vmax.f32 %v441, 0.0
  %v482 = vmax.f32 %v443, 0.0
  %v483 = vmax.f32 %v446, 0.0
  %v484 = vmax.f32 %v448, 0.0
  %v485 = vmax.f32 %v451, 0.0
  %v486 = vmax.f32 %v453, 0.0
  %v487 = vpack.c.bf16 %v455, %v455
  %v488 = vpack.c.bf16 %v456, %v456
  %v489 = vpack.c.bf16 %v457, %v457
  %v490 = vpack.c.bf16 %v458, %v458
  %v491 = vpack.c.bf16 %v459, %v459
  %v492 = vpack.c.bf16 %v460, %v460
  %v493 = vpack.c.bf16 %v461, %v461
  %v494 = vpack.c.bf16 %v462, %v462
  %v495 = vpack.c.bf16 %v463, %v463
  %v496 = vpack.c.bf16 %v464, %v464
  %v497 = vpack.c.bf16 %v465, %v465
  %v498 = vpack.c.bf16 %v466, %v466
  %v499 = vpack.c.bf16 %v467, %v467
  %v500 = vpack.c.bf16 %v468, %v468
  %v501 = vpack.c.bf16 %v469, %v469
  %v502 = vpack.c.bf16 %v470, %v470
  %v503 = vpack.c.bf16 %v471, %v471
  %v504 = vpack.c.bf16 %v472, %v472
  %v505 = vpack.c.bf16 %v473, %v473
  %v506 = vpack.c.bf16 %v474, %v474
  %v507 = vpack.c.bf16 %v475, %v475
  %v508 = vpack.c.bf16 %v476, %v476
  %v509 = vpack.c.bf16 %v477, %v477
  %v510 = vpack.c.bf16 %v478, %v478
  %v511 = vpack.c.bf16 %v479, %v479
  %v512 = vpack.c.bf16 %v480, %v480
  %v513 = vpack.c.bf16 %v481, %v481
  %v514 = vpack.c.bf16 %v482, %v482
  %v515 = vpack.c.bf16 %v483, %v483
  %v516 = vpack.c.bf16 %v484, %v484
  %v517 = vpack.c.bf16 %v485, %v485
  %v518 = vpack.c.bf16 %v486, %v486
  %v519 = vunpack.c.l.bf16 %v487
  %v520 = vunpack.c.l.bf16 %v488
  %v521 = vunpack.c.l.bf16 %v489
  %v522 = vunpack.c.l.bf16 %v490
  %v523 = vunpack.c.l.bf16 %v491
  %v524 = vunpack.c.l.bf16 %v492
  %v525 = vunpack.c.l.bf16 %v493
  %v526 = vunpack.c.l.bf16 %v494
  %v527 = vunpack.c.l.bf16 %v495
  %v528 = vunpack.c.l.bf16 %v496
  %v529 = vunpack.c.l.bf16 %v497
  %v530 = vunpack.c.l.bf16 %v498
  %v531 = vunpack.c.l.bf16 %v499
  %v532 = vunpack.c.l.bf16 %v500
  %v533 = vunpack.c.l.bf16 %v501
  %v534 = vunpack.c.l.bf16 %v502
  %v535 = vunpack.c.l.bf16 %v503
  %v536 = vunpack.c.l.bf16 %v504
  %v537 = vunpack.c.l.bf16 %v505
  %v538 = vunpack.c.l.bf16 %v506
  %v539 = vunpack.c.l.bf16 %v507
  %v540 = vunpack.c.l.bf16 %v508
  %v541 = vunpack.c.l.bf16 %v509
  %v542 = vunpack.c.l.bf16 %v510
  %v543 = vunpack.c.l.bf16 %v511
  %v544 = vunpack.c.l.bf16 %v512
  %v545 = vunpack.c.l.bf16 %v513
  %v546 = vunpack.c.l.bf16 %v514
  %v547 = vunpack.c.l.bf16 %v515
  %v548 = vunpack.c.l.bf16 %v516
  %v549 = vunpack.c.l.bf16 %v517
  %v550 = vunpack.c.l.bf16 %v518
  %v551 = vperm.slane %v39, 0
  %v552 = vmul.f32 %v519, %v551
  %v553 = vmul.f32 %v520, %v551
  %v554 = vmul.f32 %v521, %v551
  %v555 = vmul.f32 %v522, %v551
  %v556 = vmul.f32 %v523, %v551
  %v557 = vmul.f32 %v524, %v551
  %v558 = vmul.f32 %v525, %v551
  %v559 = vmul.f32 %v526, %v551
  %v560 = vmul.f32 %v527, %v551
  %v561 = vmul.f32 %v528, %v551
  %v562 = vmul.f32 %v529, %v551
  %v563 = vmul.f32 %v530, %v551
  %v564 = vmul.f32 %v531, %v551
  %v565 = vmul.f32 %v532, %v551
  %v566 = vmul.f32 %v533, %v551
  %v567 = vmul.f32 %v534, %v551
  %v568 = vmul.f32 %v535, %v551
  %v569 = vmul.f32 %v536, %v551
  %v570 = vmul.f32 %v537, %v551
  %v571 = vmul.f32 %v538, %v551
  %v572 = vmul.f32 %v539, %v551
  %v573 = vmul.f32 %v540, %v551
  %v574 = vmul.f32 %v541, %v551
  %v575 = vmul.f32 %v542, %v551
  %v576 = vmul.f32 %v543, %v551
  %v577 = vmul.f32 %v544, %v551
  %v578 = vmul.f32 %v545, %v551
  %v579 = vmul.f32 %v546, %v551
  %v580 = vmul.f32 %v547, %v551
  %v581 = vmul.f32 %v548, %v551
  %v582 = vmul.f32 %v549, %v551
  %v583 = vmul.f32 %v550, %v551
  %v584 = vsel %vm313, %v552, 0.0
  %585 = vadd.xlane.f32.xlu0 %v584
  %v586 = vpop.xlane.xlu0 %585
  %v587 = vsel %vm313, %v553, 0.0
  %588 = vadd.xlane.f32.xlu0 %v587
  %v589 = vpop.xlane.xlu0 %588
  %v590 = vsel %vm313, %v554, 0.0
  %591 = vadd.xlane.f32.xlu0 %v590
  %v592 = vpop.xlane.xlu0 %591
  %v593 = vsel %vm313, %v555, 0.0
  %594 = vadd.xlane.f32.xlu0 %v593
  %v595 = vpop.xlane.xlu0 %594
  %v596 = vsel %vm313, %v556, 0.0
  %597 = vadd.xlane.f32.xlu0 %v596
  %v598 = vpop.xlane.xlu0 %597
  %v599 = vsel %vm313, %v557, 0.0
  %600 = vadd.xlane.f32.xlu0 %v599
  %v601 = vpop.xlane.xlu0 %600
  %v602 = vsel %vm313, %v558, 0.0
  %603 = vadd.xlane.f32.xlu0 %v602
  %v604 = vpop.xlane.xlu0 %603
  %v605 = vsel %vm313, %v559, 0.0
  %606 = vadd.xlane.f32.xlu0 %v605
  %v607 = vpop.xlane.xlu0 %606
  %v608 = vsel %vm313, %v560, 0.0
  %609 = vadd.xlane.f32.xlu0 %v608
  %v610 = vpop.xlane.xlu0 %609
  %v611 = vsel %vm313, %v561, 0.0
  %612 = vadd.xlane.f32.xlu0 %v611
  %v613 = vpop.xlane.xlu0 %612
  %v614 = vsel %vm313, %v562, 0.0
  %615 = vadd.xlane.f32.xlu0 %v614
  %v616 = vpop.xlane.xlu0 %615
  %v617 = vsel %vm313, %v563, 0.0
  %618 = vadd.xlane.f32.xlu0 %v617
  %v619 = vpop.xlane.xlu0 %618
  %v620 = vsel %vm313, %v564, 0.0
  %621 = vadd.xlane.f32.xlu0 %v620
  %v622 = vpop.xlane.xlu0 %621
  %v623 = vsel %vm313, %v565, 0.0
  %624 = vadd.xlane.f32.xlu0 %v623
  %v625 = vpop.xlane.xlu0 %624
  %v626 = vsel %vm313, %v566, 0.0
  %627 = vadd.xlane.f32.xlu0 %v626
  %v628 = vpop.xlane.xlu0 %627
  %v629 = vsel %vm313, %v567, 0.0
  %630 = vadd.xlane.f32.xlu0 %v629
  %v631 = vpop.xlane.xlu0 %630
  %v632 = vsel %vm313, %v568, 0.0
  %633 = vadd.xlane.f32.xlu0 %v632
  %v634 = vpop.xlane.xlu0 %633
  %v635 = vsel %vm313, %v569, 0.0
  %636 = vadd.xlane.f32.xlu0 %v635
  %v637 = vpop.xlane.xlu0 %636
  %v638 = vsel %vm313, %v570, 0.0
  %639 = vadd.xlane.f32.xlu0 %v638
  %v640 = vpop.xlane.xlu0 %639
  %v641 = vsel %vm313, %v571, 0.0
  %642 = vadd.xlane.f32.xlu0 %v641
  %v643 = vpop.xlane.xlu0 %642
  %v644 = vsel %vm313, %v572, 0.0
  %645 = vadd.xlane.f32.xlu0 %v644
  %v646 = vpop.xlane.xlu0 %645
  %v647 = vsel %vm313, %v573, 0.0
  %648 = vadd.xlane.f32.xlu0 %v647
  %v649 = vpop.xlane.xlu0 %648
  %v650 = vsel %vm313, %v574, 0.0
  %651 = vadd.xlane.f32.xlu0 %v650
  %v652 = vpop.xlane.xlu0 %651
  %v653 = vsel %vm313, %v575, 0.0
  %654 = vadd.xlane.f32.xlu0 %v653
  %v655 = vpop.xlane.xlu0 %654
  %v656 = vsel %vm313, %v576, 0.0
  %657 = vadd.xlane.f32.xlu0 %v656
  %v658 = vpop.xlane.xlu0 %657
  %v659 = vsel %vm313, %v577, 0.0
  %660 = vadd.xlane.f32.xlu0 %v659
  %v661 = vpop.xlane.xlu0 %660
  %v662 = vsel %vm313, %v578, 0.0
  %663 = vadd.xlane.f32.xlu0 %v662
  %v664 = vpop.xlane.xlu0 %663
  %v665 = vsel %vm313, %v579, 0.0
  %666 = vadd.xlane.f32.xlu0 %v665
  %v667 = vpop.xlane.xlu0 %666
  %v668 = vsel %vm313, %v580, 0.0
  %669 = vadd.xlane.f32.xlu0 %v668
  %v670 = vpop.xlane.xlu0 %669
  %v671 = vsel %vm313, %v581, 0.0
  %672 = vadd.xlane.f32.xlu0 %v671
  %v673 = vpop.xlane.xlu0 %672
  %v674 = vsel %vm313, %v582, 0.0
  %675 = vadd.xlane.f32.xlu0 %v674
  %v676 = vpop.xlane.xlu0 %675
  %v677 = vsel %vm313, %v583, 0.0
  %678 = vadd.xlane.f32.xlu0 %v677
  %v679 = vpop.xlane.xlu0 %678
  %v681 = vperm.slane %v42, 0
  %v683 = vadd.f32 %v586, %v681
  %v684 = vadd.f32 %v589, %v681
  %v685 = vadd.f32 %v592, %v681
  %v686 = vadd.f32 %v595, %v681
  %v687 = vadd.f32 %v598, %v681
  %v688 = vadd.f32 %v601, %v681
  %v689 = vadd.f32 %v604, %v681
  %v690 = vadd.f32 %v607, %v681
  %v691 = vadd.f32 %v610, %v681
  %v692 = vadd.f32 %v613, %v681
  %v693 = vadd.f32 %v616, %v681
  %v694 = vadd.f32 %v619, %v681
  %v695 = vadd.f32 %v622, %v681
  %v696 = vadd.f32 %v625, %v681
  %v697 = vadd.f32 %v628, %v681
  %v698 = vadd.f32 %v631, %v681
  %v699 = vadd.f32 %v634, %v681
  %v700 = vadd.f32 %v637, %v681
  %v701 = vadd.f32 %v640, %v681
  %v702 = vadd.f32 %v643, %v681
  %v703 = vadd.f32 %v646, %v681
  %v704 = vadd.f32 %v649, %v681
  %v705 = vadd.f32 %v652, %v681
  %v706 = vadd.f32 %v655, %v681
  %v707 = vadd.f32 %v658, %v681
  %v708 = vadd.f32 %v661, %v681
  %v709 = vadd.f32 %v664, %v681
  %v710 = vadd.f32 %v667, %v681
  %v711 = vadd.f32 %v670, %v681
  %v712 = vadd.f32 %v673, %v681
  %v713 = vadd.f32 %v676, %v681
  %v714 = vadd.f32 %v679, %v681
  %vm715 = vcmask 7168
  %716 = vst.msk [vmem:[%s7] sm:$0xff] %vm715, %v683
  %717 = vst.msk [vmem:[%s7 + $0x8] sm:$0xff] %vm715, %v684
  %718 = vst.msk [vmem:[%s7 + $0x10] sm:$0xff] %vm715, %v685
  %719 = vst.msk [vmem:[%s7 + $0x18] sm:$0xff] %vm715, %v686
  %720 = vst.msk [vmem:[%s7 + $0x20] sm:$0xff] %vm715, %v687
  %721 = vst.msk [vmem:[%s7 + $0x28] sm:$0xff] %vm715, %v688
  %722 = vst.msk [vmem:[%s7 + $0x30] sm:$0xff] %vm715, %v689
  %723 = vst.msk [vmem:[%s7 + $0x38] sm:$0xff] %vm715, %v690
  %724 = vst.msk [vmem:[%s7 + $0x40] sm:$0xff] %vm715, %v691
  %725 = vst.msk [vmem:[%s7 + $0x48] sm:$0xff] %vm715, %v692
  %726 = vst.msk [vmem:[%s7 + $0x50] sm:$0xff] %vm715, %v693
  %727 = vst.msk [vmem:[%s7 + $0x58] sm:$0xff] %vm715, %v694
  %728 = vst.msk [vmem:[%s7 + $0x60] sm:$0xff] %vm715, %v695
  %729 = vst.msk [vmem:[%s7 + $0x68] sm:$0xff] %vm715, %v696
  %730 = vst.msk [vmem:[%s7 + $0x70] sm:$0xff] %vm715, %v697
  %731 = vst.msk [vmem:[%s7 + $0x78] sm:$0xff] %vm715, %v698
  %732 = vst.msk [vmem:[%s7 + $0x80] sm:$0xff] %vm715, %v699
  %733 = vst.msk [vmem:[%s7 + $0x88] sm:$0xff] %vm715, %v700
  %734 = vst.msk [vmem:[%s7 + $0x90] sm:$0xff] %vm715, %v701
  %735 = vst.msk [vmem:[%s7 + $0x98] sm:$0xff] %vm715, %v702
  %736 = vst.msk [vmem:[%s7 + $0xa0] sm:$0xff] %vm715, %v703
  %737 = vst.msk [vmem:[%s7 + $0xa8] sm:$0xff] %vm715, %v704
  %738 = vst.msk [vmem:[%s7 + $0xb0] sm:$0xff] %vm715, %v705
  %739 = vst.msk [vmem:[%s7 + $0xb8] sm:$0xff] %vm715, %v706
  %740 = vst.msk [vmem:[%s7 + $0xc0] sm:$0xff] %vm715, %v707
  %741 = vst.msk [vmem:[%s7 + $0xc8] sm:$0xff] %vm715, %v708
  %742 = vst.msk [vmem:[%s7 + $0xd0] sm:$0xff] %vm715, %v709
  %743 = vst.msk [vmem:[%s7 + $0xd8] sm:$0xff] %vm715, %v710
  %744 = vst.msk [vmem:[%s7 + $0xe0] sm:$0xff] %vm715, %v711
  %745 = vst.msk [vmem:[%s7 + $0xe8] sm:$0xff] %vm715, %v712
  %746 = vst.msk [vmem:[%s7 + $0xf0] sm:$0xff] %vm715, %v713
  %747 = vst.msk [vmem:[%s7 + $0xf8] sm:$0xff] %vm715, %v714
  // Predicated region
  $region30: #{heuristic_net_forward.1} parent=0 // pred_check
    _
  $region31: #{heuristic_net_forward.1} parent=0 // pred_check_branch
    %749 = sbr.rel (0) target = $region33
  $region32: #{heuristic_net_forward.1} parent=0 // pred_region
    _
  $region33: #{heuristic_net_forward.1} parent=0 // pred_fallthru
    _
  // Predicated region
  $region34: #{heuristic_net_forward.1} parent=0 // pred_check
    _
  $region35: #{heuristic_net_forward.1} parent=0 // pred_check_branch
    %751 = sbr.rel (0) target = $region37
  $region36: #{heuristic_net_forward.1} parent=0 // pred_region
    _
  $region37: #{heuristic_net_forward.1} parent=0 // pred_fallthru
    _

</llo_original>
